<compile_context>
chip_gen: v7x
topology: tpu7x:2x2x1
jax: 0.10.0
libtpu: 0.0.40
codegen_flags: <defaults>
</compile_context>

<pallas_src>
import math

import jax
import jax.numpy as jnp
from jax.experimental import pallas as pl
from jax.experimental.pallas import tpu as pltpu


def _round_up(x, m):
    return (x + m - 1) // m * m


def _sublane_granule(dtype):
    # second-to-last-dim granule: 8 for 4-byte, 16 for 2-byte, 32 for 1-byte
    return max(8, 32 // jnp.dtype(dtype).itemsize)


def _freq_table(dim):
    half_dim = dim // 2
    denom = max(half_dim - 1, 1)          # guarded (see header note)
    scale = math.log(10000.0) / denom
    return jnp.exp(jnp.arange(half_dim, dtype=jnp.float32) * -scale)[None, :]


def _pick_tile_b(B, bytes_per_row, out_dtype, *,
                 vmem_budget=8 * 1024 * 1024, min_grid_steps=2):
    granule = _sublane_granule(out_dtype)
    tile_b = vmem_budget // (2 * max(bytes_per_row, 1))     # double-buffered
    tile_b = max(granule, min(8192, (tile_b // granule) * granule))
    # Don't over-tile tiny batches (last block may be partial; Pallas masks it).
    tile_b = min(tile_b, _round_up(B, granule))
    # v7x: keep >= 2 grid steps so dimension_semantics=("parallel",) can shard
    # the batch tiles across the two TensorCores (no-op for tiny B / 1-TC).
    if B >= min_grid_steps * granule:
        tile_b = min(tile_b, _round_up(pl.cdiv(B, min_grid_steps), granule))
    return tile_b


# --------------------------------------------------------------------------
# Standalone embedding kernel (exact module semantics)
# --------------------------------------------------------------------------
def _sinusoidal_kernel(time_ref, freq_ref, out_ref):
    # time_ref: (TILE_B, 1)  freq_ref: (1, half_dim)  out_ref: (TILE_B, dim)
    half_dim = freq_ref.shape[-1]
    dim = out_ref.shape[-1]

    # Broadcast outer product on the VPU; sin/cos on the EUP; math in f32,
    # cast only at the store (bf16-output friendly, incl. v5e w/o bf16 VALU).
    args = time_ref[...] * freq_ref[...]
    out_ref[:, :half_dim] = jnp.sin(args).astype(out_ref.dtype)
    out_ref[:, half_dim:2 * half_dim] = jnp.cos(args).astype(out_ref.dtype)
    if dim > 2 * half_dim:               # odd dim -> trailing zero column
        out_ref[:, 2 * half_dim:] = jnp.zeros(
            (out_ref.shape[0], dim - 2 * half_dim), out_ref.dtype)


def sinusoidal_position_embeddings(time, dim, *, out_dtype=jnp.float32,
                                   tile_b=None):
    """JAX/Pallas equivalent of SinusoidalPositionEmbeddings(dim)(time)."""
    if dim < 2:
        raise ValueError("dim must be >= 2")
    time = jnp.asarray(time, jnp.float32)
    if time.ndim == 1:
        time = time[:, None]             # (B,) -> (B, 1), mirrors unsqueeze(1)
    B = time.shape[0]
    half_dim = dim // 2
    freqs = _freq_table(dim)

    if tile_b is None:
        out_bytes = jnp.dtype(out_dtype).itemsize
        tile_b = _pick_tile_b(B, out_bytes * dim + 4, out_dtype)

    grid = (pl.cdiv(B, tile_b),)
    return pl.pallas_call(
        _sinusoidal_kernel,
        out_shape=jax.ShapeDtypeStruct((B, dim), out_dtype),
        grid=grid,
        in_specs=[
            pl.BlockSpec((tile_b, 1), lambda i: (i, 0)),     # time tile
            pl.BlockSpec((1, half_dim), lambda i: (0, 0)),   # freq table
        ],
        out_specs=pl.BlockSpec((tile_b, dim), lambda i: (i, 0)),
        compiler_params=pltpu.CompilerParams(
            dimension_semantics=("parallel",)),
    )(time, freqs)


# --------------------------------------------------------------------------
# Fused embedding + Linear(dim -> hidden) kernel (optional consumer fusion)
# --------------------------------------------------------------------------
def _sinusoidal_linear_kernel(time_ref, freq_ref, w_ref, out_ref):
    # time_ref: (TILE_B, 1)  freq_ref: (1, half)  w_ref: (dim, H)
    # out_ref: (TILE_B, H)
    half_dim = freq_ref.shape[-1]
    args = time_ref[...] * freq_ref[...]
    s = jnp.sin(args)
    c = jnp.cos(args)
    # emb @ W == sin @ W[:half] + cos @ W[half:2*half]; an odd-dim zero pad
    # column contributes nothing, so W's last row is correctly skipped.
    acc = jnp.dot(s, w_ref[:half_dim, :], preferred_element_type=jnp.float32)
    acc = acc + jnp.dot(c, w_ref[half_dim:2 * half_dim, :],
                        preferred_element_type=jnp.float32)
    out_ref[...] = acc.astype(out_ref.dtype)


def sinusoidal_position_embeddings_linear(time, dim, w, *, out_dtype=None,
                                          tile_b=None):
    """Fused `SinusoidalPositionEmbeddings(dim)(time) @ w` (w: (dim, hidden)).

    Keeps w resident in VMEM and runs the projection on the idle MXU, so the
    (B, dim) embedding never round-trips through HBM.
    """
    if dim < 2:
        raise ValueError("dim must be >= 2")
    time = jnp.asarray(time, jnp.float32)
    if time.ndim == 1:
        time = time[:, None]
    B = time.shape[0]
    half_dim = dim // 2
    w = jnp.asarray(w)
    if w.shape[0] != dim:
        raise ValueError(f"w must have shape (dim, hidden), got {w.shape}")
    hidden = w.shape[1]
    if out_dtype is None:
        out_dtype = w.dtype
    freqs = _freq_table(dim)

    if tile_b is None:
        out_bytes = jnp.dtype(out_dtype).itemsize
        w_bytes = 2 * w.size * w.dtype.itemsize          # pipeline buffers
        budget = max(2 * 1024 * 1024, 8 * 1024 * 1024 - w_bytes)
        tile_b = _pick_tile_b(B, out_bytes * hidden + 4, out_dtype,
                              vmem_budget=budget)

    grid = (pl.cdiv(B, tile_b),)
    return pl.pallas_call(
        _sinusoidal_linear_kernel,
        out_shape=jax.ShapeDtypeStruct((B, hidden), out_dtype),
        grid=grid,
        in_specs=[
            pl.BlockSpec((tile_b, 1), lambda i: (i, 0)),     # time tile
            pl.BlockSpec((1, half_dim), lambda i: (0, 0)),   # freq table
            pl.BlockSpec((dim, hidden), lambda i: (0, 0)),   # resident W
        ],
        out_specs=pl.BlockSpec((tile_b, hidden), lambda i: (i, 0)),
        compiler_params=pltpu.CompilerParams(
            dimension_semantics=("parallel",)),
    )(time, freqs, w)


# --------------------------------------------------------------------------
# Pure-JAX reference
# --------------------------------------------------------------------------
def _reference(time, dim):
    time = jnp.asarray(time, jnp.float32)
    if time.ndim == 1:
        time = time[:, None]
    half_dim = dim // 2
    denom = max(half_dim - 1, 1)
    scale = math.log(10000.0) / denom
    freqs = jnp.exp(jnp.arange(half_dim, dtype=jnp.float32) * -scale)
    args = time * freqs[None, :]
    emb = jnp.concatenate([jnp.sin(args), jnp.cos(args)], axis=-1)
    if dim % 2 == 1:
        emb = jnp.pad(emb, ((0, 0), (0, 1)))
    return emb


if __name__ == "__main__":
    key = jax.random.PRNGKey(0)
    k_t, k_t2, k_w = jax.random.split(key, 3)

    # Diffusion-style integer timesteps, cast to float.
    B, dim, hidden = 8, 32, 128
    time = jax.random.randint(k_t, (B,), 0, 1000).astype(jnp.float32)

    # 1) Standalone embedding, even dim, f32.
    out = jax.block_until_ready(sinusoidal_position_embeddings(time, dim))
    ref = _reference(time, dim)
    assert out.shape == (B, dim), out.shape
    assert jnp.allclose(out, ref, atol=1e-5, rtol=1e-5), "mismatch (even dim)"

    # 2) Odd dim (zero-pad column) path.
    out_odd = jax.block_until_ready(sinusoidal_position_embeddings(time, 33))
    ref_odd = _reference(time, 33)
    assert out_odd.shape == (B, 33), out_odd.shape
    assert jnp.allclose(out_odd, ref_odd, atol=1e-5, rtol=1e-5), \
        "mismatch (odd dim)"

    # 3) bf16 output path (math in f32, cast at the store).
    time16 = jax.random.randint(k_t2, (16,), 0, 1000).astype(jnp.float32)
    out_bf16 = jax.block_until_ready(
        sinusoidal_position_embeddings(time16, dim, out_dtype=jnp.bfloat16))
    ref_bf16 = _reference(time16, dim)
    assert out_bf16.dtype == jnp.bfloat16
    assert jnp.allclose(out_bf16.astype(jnp.float32), ref_bf16,
                        atol=2e-2, rtol=2e-2), "mismatch (bf16)"

    # 4) Fused embedding + Linear projection (MXU, W resident in VMEM).
    w1 = jax.random.normal(k_w, (dim, hidden), jnp.float32) * 0.02
    out_fused = jax.block_until_ready(
        sinusoidal_position_embeddings_linear(time, dim, w1))
    ref_fused = _reference(time, dim) @ w1
    assert out_fused.shape == (B, hidden), out_fused.shape
    assert jnp.allclose(out_fused, ref_fused, atol=1e-4, rtol=1e-4), \
        "mismatch (fused linear)"

    print("KERNEL_OK")
</pallas_src>

<mosaic_0001>
module attributes {stable_mosaic.version = 11 : i64} {
  func.func @_sinusoidal_kernel(%arg0: i32, %arg1: memref<8x1xf32, #tpu.memory_space<vmem>>, %arg2: memref<1x16xf32, #tpu.memory_space<vmem>>, %arg3: memref<8x32xf32, #tpu.memory_space<vmem>>) attributes {dimension_semantics = [#tpu.dimension_semantics<parallel>], iteration_bounds = array<i64: 1>, scalar_prefetch = 0 : i64, scratch_operands = 0 : i64, tpu.core_type = #tpu.core_type<tc>, window_params = [{transform_indices = @transform_0, window_bounds = array<i64: 8, 1>}, {pipeline_mode = #tpu.pipeline_mode<synchronous>, transform_indices = @transform_1, window_bounds = array<i64: 1, 16>}, {transform_indices = @transform_2, window_bounds = array<i64: 8, 32>}]} {
    %c0 = arith.constant 0 : index
    %c0_0 = arith.constant 0 : index
    %0 = vector.load %arg1[%c0, %c0_0] : memref<8x1xf32, #tpu.memory_space<vmem>>, vector<8x1xf32>
    %c0_1 = arith.constant 0 : index
    %c0_2 = arith.constant 0 : index
    %1 = vector.load %arg2[%c0_1, %c0_2] : memref<1x16xf32, #tpu.memory_space<vmem>>, vector<1x16xf32>
    %2 = vector.broadcast %0 : vector<8x1xf32> to vector<8x16xf32>
    %3 = vector.broadcast %1 : vector<1x16xf32> to vector<8x16xf32>
    %4 = arith.mulf %2, %3 : vector<8x16xf32>
    %5 = math.sin %4 : vector<8x16xf32>
    %c0_3 = arith.constant 0 : index
    %c0_4 = arith.constant 0 : index
    %6 = vector.load %arg3[%c0_3, %c0_4] : memref<8x32xf32, #tpu.memory_space<vmem>>, vector<8x16xf32>
    tpu.vector_store %arg3[%c0_3, %c0_4], %5 {strides = array<i32>} : memref<8x32xf32, #tpu.memory_space<vmem>>, vector<8x16xf32>,
    %7 = math.cos %4 : vector<8x16xf32>
    %c0_5 = arith.constant 0 : index
    %c16 = arith.constant 16 : index
    %8 = vector.load %arg3[%c0_5, %c16] : memref<8x32xf32, #tpu.memory_space<vmem>>, vector<8x16xf32>
    tpu.vector_store %arg3[%c0_5, %c16], %7 {strides = array<i32>} : memref<8x32xf32, #tpu.memory_space<vmem>>, vector<8x16xf32>,
    return
  }
  func.func @transform_0(%arg0: i32) -> (i32, i32) {
    %c0_i32 = arith.constant 0 : i32
    %c0_i32_0 = arith.constant 0 : i32
    return %arg0, %c0_i32 : i32, i32
  }
  func.func @transform_1(%arg0: i32) -> (i32, i32) {
    %c0_i32 = arith.constant 0 : i32
    %c0_i32_0 = arith.constant 0 : i32
    %c0_i32_1 = arith.constant 0 : i32
    return %c0_i32, %c0_i32_0 : i32, i32
  }
  func.func @transform_2(%arg0: i32) -> (i32, i32) {
    %c0_i32 = arith.constant 0 : i32
    %c0_i32_0 = arith.constant 0 : i32
    return %arg0, %c0_i32 : i32, i32
  }
}

</mosaic_0001>

<llo_original>
// kernel: tpu_custom_call.1
$region0: #{tpu_custom_call.1}
  #allocation0 [shape = 'u32[]', space=smem, size = 0x4, offset = 0x4, fixed_abs, tag = 'smem constant byte address 0x4 - core index']
  #allocation1 [shape = 'u32[144,128]{1,0:T(1,128)}', space=vmem, size = 0x12000, scoped, tag = 'internal scratch']
  %s0 = inlined_call_operand.vmem [shape: f32[8,1], index: 0, kind: input, shape index: {}]
  %s1 = inlined_call_operand.vmem [shape: f32[1,16], index: 1, kind: input, shape index: {}]
  %s2 = inlined_call_operand.hbm [shape: f32[8,32], index: 2, kind: output, shape index: {}]
  %s3 = sld [smem:[#allocation0]]
  $region18: #{tpu_custom_call.1} parent=0
    _
  %s5 = ssub.s32 1, %s3
  %s6 = scalar_select 0, %s5, %s3
  $region1: #{tpu_custom_call.1} parent=0
    #allocation2 [shape = 'u8[4096]{0}', space=vmem, size = 0x1000, scoped, tag = 'output window, operand 0, single buffered']
    #allocation3 [shape = 's32[1]{0}', space=sflag, size = 0x4, scoped, tag = 'scoped memory for tpu_custom_call.1']
    %7 = vsyncpa [#allocation3], 0
    // Predicated region
    $region2: #{tpu_custom_call.1} parent=1 // pred_check
      _
    $region3: #{tpu_custom_call.1} parent=1 // pred_check_branch
      %9 = sbr.rel (0) target = $region5
    $region4: #{tpu_custom_call.1} parent=1 // pred_region
      _
    $region5: #{tpu_custom_call.1} parent=1 // pred_fallthru
      _
    // Predicated region
    $region6: #{tpu_custom_call.1} parent=1 // pred_check
      _
    $region7: #{tpu_custom_call.1} parent=1 // pred_check_branch
      %11 = sbr.rel (0) target = $region9
    $region8: #{tpu_custom_call.1} parent=1 // pred_region
      _
    $region9: #{tpu_custom_call.1} parent=1 // pred_fallthru
      _
    %v12 = vld [vmem:[%s0] sm:$0xff]
    %v13 = vld [vmem:[%s1] sm:$0x1]
    %15 = vset.pattern.permute.xlu0 0
    %16 = vperm.xlu0 %15, %v12
    %v17 = vpop.permute.xlu0 %16
    %v20 = vlaneseq
    %v21 = vshrl.u32 %v20, 7
    %v22 = vsub.s32 0, %v21
    %v23 = vrot.slane %v13, %v22
    %v25 = vmul.f32 %v17, %v23
    %v26 = vand.u32 2147483647, %v25
    %vm27 = vcmp.le.f32.partialorder %v26, 0.7853982
    %vm28 = vcmp.lt.s32.totalorder %v25, 0
    %v29 = vand.u32 %v25, 2139095040
    %v30 = vshrl.u32 %v29, 23
    %v31 = vsub.s32 %v30, 127
    %v32 = vand.u32 2147483647, %v25
    %v33 = vand.u32 %v32, 8388607
    %v34 = vor.u32 %v33, 8388608
    %v35 = vsub.s32 0, %v34
    %v36 = vadd.s32 %v31, 1
    %vm37 = vcmp.gt.s32.totalorder %v36, 0
    %v38 = vsel %vm37, %v36, 0
    %v39 = vshrl.u32 %v38, 5
    %v40 = vand.u32 %v38, 31
    %v41 = vsub.s32 32, %v40
    %v42 = vshrl.u32 683565275, %v41
    %v43 = vshll.u32 683565275, %v40
    %v44 = vshrl.u32 2475754826, %v41
    %v45 = vor.u32 %v43, %v44
    %v46 = vshll.u32 2475754826, %v40
    %v47 = vshrl.u32 2131351028, %v41
    %v48 = vor.u32 %v46, %v47
    %v49 = vshll.u32 2131351028, %v40
    %v50 = vshrl.u32 2102212464, %v41
    %v51 = vor.u32 %v49, %v50
    %v52 = vshll.u32 2102212464, %v40
    %v53 = vshrl.u32 920167782, %v41
    %v54 = vor.u32 %v52, %v53
    %v55 = vshll.u32 920167782, %v40
    %v56 = vshrl.u32 1326507024, %v41
    %v57 = vor.u32 %v55, %v56
    %vm58 = vcmp.lt.s32.totalorder %v39, 1
    %vm59 = vcmp.lt.s32.totalorder %v39, 2
    %vm60 = vcmp.lt.s32.totalorder %v39, 3
    %vm61 = vcmp.lt.s32.totalorder %v39, 4
    %v62 = vsel %vm58, %v42, %v45
    %v63 = vsel %vm61, %v51, 2102212464
    %v64 = vsel %vm60, %v48, %v63
    %v65 = vsel %vm59, %v62, %v64
    %v66 = vsel %vm58, %v45, %v48
    %v67 = vsel %vm61, %v54, 920167782
    %v68 = vsel %vm60, %v51, %v67
    %v69 = vsel %vm59, %v66, %v68
    %v70 = vsel %vm58, %v48, %v51
    %v71 = vsel %vm61, %v57, 1326507024
    %v72 = vsel %vm60, %v54, %v71
    %v73 = vsel %vm59, %v70, %v72
    %v74 = vshll.u32 %v34, 8
    %v75 = vmul.u32.u64.compose %v74, %v73
    %v76 = vextract.low.u32 %v75
    %v77 = vextract.high.u32 %v75
    %v78 = vmul.u32.u64.compose %v74, %v69
    %v79 = vextract.low.u32 %v78
    %v80 = vextract.high.u32 %v78
    %v81 = vmul.u32 %v74, %v65
    %v82 = vadd.s32 %v77, %v79
    %vm83 = vc.u32 %v77, %v79
    %v84 = vadd.s32 %v80, 1
    %v85 = vsel %vm83, %v84, %v80
    %v86 = vadd.s32 %v81, %v85
    %v87 = vadd.s32 %v86, 536870912
    %v88 = vshrl.u32 %v87, 30
    %v89 = vshll.u32 %v88, 30
    %v90 = vsub.s32 %v86, %v89
    %vm91 = vcmp.lt.s32.totalorder %v90, 0
    %v92 = vsub.s32 0, %v90
    %v93 = vsel %vm91, %v92, %v90
    %v94 = vclz %v93
    %v95 = vsub.s32 %v94, 2
    %vm96 = vcmp.gt.s32.totalorder 0, %v95
    %v97 = vsel %vm96, 0, %v95
    %v98 = vsub.s32 32, %v97
    %v99 = vshll.u32 %v90, %v97
    %v100 = vshrl.u32 %v82, %v98
    %v101 = vor.u32 %v99, %v100
    %v102 = vsub.s32 4294967266, %v97
    %v103 = vadd.s32 %v102, 127
    %v104 = vshll.u32 %v103, 23
    %v105 = vor.u32 4788187, %v104
    %v106 = vand.u32 2147483647, %v105
    %v108 = vcvt.s32.f32 %v101
    %v109 = vmul.f32 %v108, %v106
    %v110 = vxor.u32 %v109, 2147483648
    %v111 = vsel %vm28, %v110, %v109
    %v112 = vsub.s32 4, %v88
    %v113 = vsel %vm28, %v112, %v88
    %v114 = vsel %vm27, %v25, %v111
    %v115 = vsel %vm27, 0, %v113
    %v116 = vcosq.f32.pop %v114
    %v117 = vsinq.f32.pop %v114
    %vm118 = vweird.f32 %v25
    %v119 = vadd.s32 %v115, 3
    %v120 = vand.u32 %v119, 3
    %vm121 = vcmp.lt.s32.totalorder %v120, 2
    %vm122 = vcmp.eq.s32.totalorder %v120, 0
    %v123 = vxor.u32 %v117, 2147483648
    %v124 = vsel %vm122, %v116, %v123
    %vm125 = vcmp.eq.s32.totalorder %v120, 2
    %v126 = vxor.u32 %v116, 2147483648
    %v127 = vsel %vm125, %v126, %v117
    %v128 = vsel %vm121, %v124, %v127
    %v129 = vsel %vm118, nan, %v128
    %vm130 = vcmask 130048
    %131 = vst.msk [vmem:[#allocation2] sm:$0xff] %vm130, %v129
    %v132 = vand.u32 2147483647, %v25
    %vm133 = vcmp.le.f32.partialorder %v132, 0.7853982
    %vm134 = vcmp.lt.s32.totalorder %v25, 0
    %v135 = vand.u32 %v25, 2139095040
    %v136 = vshrl.u32 %v135, 23
    %v137 = vsub.s32 %v136, 127
    %v138 = vand.u32 2147483647, %v25
    %v139 = vand.u32 %v138, 8388607
    %v140 = vor.u32 %v139, 8388608
    %v141 = vsub.s32 0, %v140
    %v142 = vadd.s32 %v137, 1
    %vm143 = vcmp.gt.s32.totalorder %v142, 0
    %v144 = vsel %vm143, %v142, 0
    %v145 = vshrl.u32 %v144, 5
    %v146 = vand.u32 %v144, 31
    %v147 = vsub.s32 32, %v146
    %v148 = vshrl.u32 683565275, %v147
    %v149 = vshll.u32 683565275, %v146
    %v150 = vshrl.u32 2475754826, %v147
    %v151 = vor.u32 %v149, %v150
    %v152 = vshll.u32 2475754826, %v146
    %v153 = vshrl.u32 2131351028, %v147
    %v154 = vor.u32 %v152, %v153
    %v155 = vshll.u32 2131351028, %v146
    %v156 = vshrl.u32 2102212464, %v147
    %v157 = vor.u32 %v155, %v156
    %v158 = vshll.u32 2102212464, %v146
    %v159 = vshrl.u32 920167782, %v147
    %v160 = vor.u32 %v158, %v159
    %v161 = vshll.u32 920167782, %v146
    %v162 = vshrl.u32 1326507024, %v147
    %v163 = vor.u32 %v161, %v162
    %vm164 = vcmp.lt.s32.totalorder %v145, 1
    %vm165 = vcmp.lt.s32.totalorder %v145, 2
    %vm166 = vcmp.lt.s32.totalorder %v145, 3
    %vm167 = vcmp.lt.s32.totalorder %v145, 4
    %v168 = vsel %vm164, %v148, %v151
    %v169 = vsel %vm167, %v157, 2102212464
    %v170 = vsel %vm166, %v154, %v169
    %v171 = vsel %vm165, %v168, %v170
    %v172 = vsel %vm164, %v151, %v154
    %v173 = vsel %vm167, %v160, 920167782
    %v174 = vsel %vm166, %v157, %v173
    %v175 = vsel %vm165, %v172, %v174
    %v176 = vsel %vm164, %v154, %v157
    %v177 = vsel %vm167, %v163, 1326507024
    %v178 = vsel %vm166, %v160, %v177
    %v179 = vsel %vm165, %v176, %v178
    %v180 = vshll.u32 %v140, 8
    %v181 = vmul.u32.u64.compose %v180, %v179
    %v182 = vextract.low.u32 %v181
    %v183 = vextract.high.u32 %v181
    %v184 = vmul.u32.u64.compose %v180, %v175
    %v185 = vextract.low.u32 %v184
    %v186 = vextract.high.u32 %v184
    %v187 = vmul.u32 %v180, %v171
    %v188 = vadd.s32 %v183, %v185
    %vm189 = vc.u32 %v183, %v185
    %v190 = vadd.s32 %v186, 1
    %v191 = vsel %vm189, %v190, %v186
    %v192 = vadd.s32 %v187, %v191
    %v193 = vadd.s32 %v192, 536870912
    %v194 = vshrl.u32 %v193, 30
    %v195 = vshll.u32 %v194, 30
    %v196 = vsub.s32 %v192, %v195
    %vm197 = vcmp.lt.s32.totalorder %v196, 0
    %v198 = vsub.s32 0, %v196
    %v199 = vsel %vm197, %v198, %v196
    %v200 = vclz %v199
    %v201 = vsub.s32 %v200, 2
    %vm202 = vcmp.gt.s32.totalorder 0, %v201
    %v203 = vsel %vm202, 0, %v201
    %v204 = vsub.s32 32, %v203
    %v205 = vshll.u32 %v196, %v203
    %v206 = vshrl.u32 %v188, %v204
    %v207 = vor.u32 %v205, %v206
    %v208 = vsub.s32 4294967266, %v203
    %v209 = vadd.s32 %v208, 127
    %v210 = vshll.u32 %v209, 23
    %v211 = vor.u32 4788187, %v210
    %v212 = vand.u32 2147483647, %v211
    %v214 = vcvt.s32.f32 %v207
    %v215 = vmul.f32 %v214, %v212
    %v216 = vxor.u32 %v215, 2147483648
    %v217 = vsel %vm134, %v216, %v215
    %v218 = vsub.s32 4, %v194
    %v219 = vsel %vm134, %v218, %v194
    %v220 = vsel %vm133, %v25, %v217
    %v221 = vsel %vm133, 0, %v219
    %v222 = vcosq.f32.pop %v220
    %v223 = vsinq.f32.pop %v220
    %vm224 = vweird.f32 %v25
    %v225 = vand.u32 %v221, 3
    %vm226 = vcmp.lt.s32.totalorder %v225, 2
    %vm227 = vcmp.eq.s32.totalorder %v225, 0
    %v228 = vxor.u32 %v223, 2147483648
    %v229 = vsel %vm227, %v222, %v228
    %vm230 = vcmp.eq.s32.totalorder %v225, 2
    %v231 = vxor.u32 %v222, 2147483648
    %v232 = vsel %vm230, %v231, %v223
    %v233 = vsel %vm226, %v229, %v232
    %v234 = vsel %vm224, nan, %v233
    %236 = vrot.lane.b32.xlu0 %v234, 16
    %v237 = vpop.permute.xlu0 %236
    %vm239 = vcmask 261248
    %240 = vst.msk [vmem:[#allocation2] sm:$0xff] %vm239, %v237
    // Predicated region
    $region10: #{tpu_custom_call.1} parent=1 // pred_check
      _
    $region11: #{tpu_custom_call.1} parent=1 // pred_check_branch
      %242 = sbr.rel (0) target = $region13
    $region12: #{tpu_custom_call.1} parent=1 // pred_region
      %s244 = ssub.s32 128, 128
      %245 = vsyncadd [#allocation3], %s244
      %s247 = sshll.u32 [#allocation2], 4
      %s248 = int_to_ptr.vmem [resolvable:$true] %s247
      %250 = dma.vmem_to_hbm [thread:$0]  %s248, 128, %s2, [#allocation3]
    $region13: #{tpu_custom_call.1} parent=1 // pred_fallthru
      _
    // Predicated region
    $region14: #{tpu_custom_call.1} parent=1 // pred_check
      _
    $region15: #{tpu_custom_call.1} parent=1 // pred_check_branch
      %252 = sbr.rel (0) target = $region17
    $region16: #{tpu_custom_call.1} parent=1 // pred_region
      %253 = dma.done [#allocation3], 128
    $region17: #{tpu_custom_call.1} parent=1 // pred_fallthru
      _
    %254 = vsyncpa [#allocation3], 1

</llo_original>
